<compile_context>
chip_gen: v6e
topology: v6e:2x2x1
jax: 0.10.0
libtpu: 0.0.40
codegen_flags: <defaults>
</compile_context>

<pallas_src>
import functools

import jax
import jax.numpy as jnp
from jax.experimental import pallas as pl
from jax.experimental.pallas import tpu as pltpu


_VMEM_LIMIT_BYTES = 48 * 1024 * 1024   # safe on v5e/v6e (128 MiB) and v7x (64 MiB physical)
_VMEM_BUDGET_BYTES = 36 * 1024 * 1024  # working-set budget for tile sizing / fused gate


def _round_up(a: int, b: int) -> int:
    return (a + b - 1) // b * b


def _round_down(a: int, b: int) -> int:
    return (a // b) * b


# ----------------------------------------------------------------------------- #
# Fused single-pass kernel (whole padded x resident in VMEM).
# ----------------------------------------------------------------------------- #
def _fused_kernel(off_c_ref, end_c_ref, off_r_ref, end_r_ref, inv_cnt_ref,
                  x_ref, o_ref, *, eps):
    x = x_ref[...].astype(jnp.float32)                              # [Np, Dp]
    g = off_c_ref.shape[0]
    n_rows = x.shape[0]

    # Membership matrices (graph x row and row x graph).  Padded rows (>= N)
    # belong to no graph -> all-zero rows/cols.
    rows_g = jax.lax.broadcasted_iota(jnp.int32, (g, n_rows), 1)
    m_gn = ((rows_g >= off_c_ref[...]) & (rows_g < end_c_ref[...])).astype(jnp.float32)
    rows_n = jax.lax.broadcasted_iota(jnp.int32, (n_rows, g), 0)
    m_ng = ((rows_n >= off_r_ref[...]) & (rows_n < end_r_ref[...])).astype(jnp.float32)

    inv_cnt = inv_cnt_ref[...]                                      # [G, 1]
    mu = jnp.dot(m_gn, x, preferred_element_type=jnp.float32) * inv_cnt      # [G, Dp]
    mu_rows = jnp.dot(m_ng, mu, preferred_element_type=jnp.float32)          # [Np, Dp]
    dev = x - mu_rows
    # Exact E[(x - mu)^2] (no E[x^2]-mu^2 cancellation) since x is resident.
    var = jnp.dot(m_gn, dev * dev, preferred_element_type=jnp.float32) * inv_cnt
    rstd = jax.lax.rsqrt(var + eps)
    rstd_rows = jnp.dot(m_ng, rstd, preferred_element_type=jnp.float32)
    # Padded rows: dev == 0 -> output 0 (sliced off in the wrapper).
    o_ref[...] = (dev * rstd_rows).astype(o_ref.dtype)


# ----------------------------------------------------------------------------- #
# Two-pass kernels.
# ----------------------------------------------------------------------------- #
def _stats_kernel(off_ref, end_ref, x_ref, sum_ref, sumsq_ref):
    """Accumulate per-graph sum / sum-of-squares over row tiles (MXU segment-sum).

    Grid is (2, steps): axis 0 is 'parallel' (one half of the row tiles per
    TensorCore on v7x), axis 1 is the 'arbitrary' reduction over row tiles.
    Each core owns its own [G, Dp] slice of the [2, G, Dp] partial accumulators.
    """
    step = pl.program_id(0) * pl.num_programs(1) + pl.program_id(1)
    tile = x_ref.shape[0]
    g = sum_ref.shape[0]

    @pl.when(pl.program_id(1) == 0)
    def _():
        sum_ref[...] = jnp.zeros_like(sum_ref)
        sumsq_ref[...] = jnp.zeros_like(sumsq_ref)

    # TODO(synk): for very large G, restrict membership to the <= tile+1 graphs
    # that can intersect this tile (scalar-prefetched per-tile graph window).
    rows = jax.lax.broadcasted_iota(jnp.int32, (g, tile), 1) + step * tile
    member = (rows >= off_ref[...]) & (rows < end_ref[...])         # [G, tile]

    x_in = x_ref[...]
    xf = x_in.astype(jnp.float32)
    if x_in.dtype == jnp.bfloat16:
        # bf16 MXU operands run the 256x256 MXU at full rate (v6e/v7x); f32 accum.
        sum_ref[...] += jnp.dot(member.astype(jnp.bfloat16), x_in,
                                preferred_element_type=jnp.float32)
    else:
        sum_ref[...] += jnp.dot(member.astype(jnp.float32), xf,
                                preferred_element_type=jnp.float32)
    # Keep the squared operand in f32 for precision of the variance.
    sumsq_ref[...] += jnp.dot(member.astype(jnp.float32), xf * xf,
                              preferred_element_type=jnp.float32)


def _normalize_kernel(off_ref, end_ref, ss_ref, x_ref, o_ref):
    """Normalize one row tile: one [tile,G]@[G,2Dp] MXU matmul broadcasts
    (scale, shift); out = x * scale + shift."""
    i = pl.program_id(0)
    tile = x_ref.shape[0]
    g = ss_ref.shape[0]
    dp = ss_ref.shape[1] // 2

    rows = jax.lax.broadcasted_iota(jnp.int32, (tile, g), 0) + i * tile
    onehot = ((rows >= off_ref[...]) & (rows < end_ref[...])).astype(jnp.float32)

    ss_b = jnp.dot(onehot, ss_ref[...], preferred_element_type=jnp.float32)  # [tile, 2*Dp]
    scale_b = ss_b[:, :dp]
    shift_b = ss_b[:, dp:]
    xf = x_ref[...].astype(jnp.float32)
    # Padded rows: all-zero onehot -> scale = shift = 0 -> output 0, sliced off later.
    o_ref[...] = (xf * scale_b + shift_b).astype(o_ref.dtype)


# ----------------------------------------------------------------------------- #
# Wrapper.
# ----------------------------------------------------------------------------- #
def instance_norm(x: jax.Array, counts: jax.Array, eps: float = 1e-6, *,
                  target_tile_bytes: int = 2 << 20,
                  force_two_pass: bool = False) -> jax.Array:
    """Graph instance norm. x: [N, D]; counts: [G] int32 rows per graph (sum == N)."""
    n, d = x.shape
    counts = counts.astype(jnp.int32)
    g = counts.shape[0]
    ends = jnp.cumsum(counts).astype(jnp.int32)          # [G] inclusive cumsum
    offsets = ends - counts                              # [G] exclusive cumsum
    inv_cnt = (1.0 / jnp.maximum(counts, 1).astype(jnp.float32)).reshape(g, 1)

    itemsize = jnp.dtype(x.dtype).itemsize
    d_pad = max(128, _round_up(d, 128))                  # lane-dense output stores

    # ---------- Fused single-pass path: x resident in VMEM (1 HBM read + 1 write) ----
    n8 = _round_up(max(n, 8), 8)
    fused_est = ((6 * n8 * d_pad + 2 * g * n8 + 4 * g * d_pad) * 4
                 + 2 * n8 * d_pad * itemsize)            # f32 temps + in/out blocks
    if (not force_two_pass) and fused_est <= _VMEM_BUDGET_BYTES:
        x_p = x
        if n8 != n or d_pad != d:
            x_p = jnp.pad(x, ((0, n8 - n), (0, d_pad - d)))
        out_p = pl.pallas_call(
            functools.partial(_fused_kernel, eps=eps),
            out_shape=jax.ShapeDtypeStruct((n8, d_pad), x.dtype),
            grid_spec=pltpu.PrefetchScalarGridSpec(
                num_scalar_prefetch=0,
                grid=(1,),
                in_specs=[
                    pl.BlockSpec((g, 1), lambda i: (0, 0)),        # graph start (col)
                    pl.BlockSpec((g, 1), lambda i: (0, 0)),        # graph end   (col)
                    pl.BlockSpec((1, g), lambda i: (0, 0)),        # graph start (row)
                    pl.BlockSpec((1, g), lambda i: (0, 0)),        # graph end   (row)
                    pl.BlockSpec((g, 1), lambda i: (0, 0)),        # 1/count
                    pl.BlockSpec((n8, d_pad), lambda i: (0, 0)),   # whole x
                ],
                out_specs=pl.BlockSpec((n8, d_pad), lambda i: (0, 0)),
            ),
            compiler_params=pltpu.CompilerParams(
                dimension_semantics=("arbitrary",),
                vmem_limit_bytes=_VMEM_LIMIT_BYTES,
            ),
        )(offsets.reshape(g, 1), ends.reshape(g, 1),
          offsets.reshape(1, g), ends.reshape(1, g), inv_cnt, x_p)
        return out_p[:n, :d]

    # ---------- Two-pass path (pipelined row tiles) ----------------------------------
    # Row tile sized by bytes (~target_tile_bytes per DMA step), capped so the
    # double-buffered tiles + resident [G, *] operands + f32 temps fit the VMEM budget
    # (re-derived for v7x's 64 MiB).
    tile = target_tile_bytes // (itemsize * d_pad)
    tile = max(512, min(tile, 4096))
    resident = 2 * g * d_pad * 4 + 2 * g * d_pad * 4 + 8192          # stats acc / (scale,shift)
    per_row = 4 * d_pad * itemsize + 8 * d_pad * 4                   # dbl-buf in/out + f32 temps
    cap = max(8, (_VMEM_BUDGET_BYTES - resident) // per_row)
    tile = min(tile, cap)
    tile = min(tile, _round_up(n, 8))
    tile = max(8, _round_down(tile, 8))

    n_tiles = -(-n // tile)
    steps = -(-n_tiles // 2)             # per-core steps; stats pass splits over 2 TCs (v7x)
    n_pad = 2 * steps * tile

    x_p = x
    if n_pad != n or d_pad != d:
        x_p = jnp.pad(x, ((0, n_pad - n), (0, d_pad - d)))

    # ---- Pass 1: per-graph sums / sums of squares (per-core partials) ----
    sums2, sumsq2 = pl.pallas_call(
        _stats_kernel,
        out_shape=(jax.ShapeDtypeStruct((2, g, d_pad), jnp.float32),
                   jax.ShapeDtypeStruct((2, g, d_pad), jnp.float32)),
        grid_spec=pltpu.PrefetchScalarGridSpec(
            num_scalar_prefetch=0,
            grid=(2, steps),
            in_specs=[
                pl.BlockSpec((g, 1), lambda c, i: (0, 0)),
                pl.BlockSpec((g, 1), lambda c, i: (0, 0)),
                pl.BlockSpec((tile, d_pad), lambda c, i, _s=steps: (c * _s + i, 0)),
            ],
            out_specs=[
                pl.BlockSpec((None, g, d_pad), lambda c, i: (c, 0, 0)),
                pl.BlockSpec((None, g, d_pad), lambda c, i: (c, 0, 0)),
            ],
        ),
        compiler_params=pltpu.CompilerParams(
            dimension_semantics=("parallel", "arbitrary"),
            vmem_limit_bytes=_VMEM_LIMIT_BYTES,
        ),
    )(offsets.reshape(g, 1), ends.reshape(g, 1), x_p)

    sums = sums2[0] + sums2[1]
    sumsq = sumsq2[0] + sumsq2[1]

    # ---- Tiny per-graph stats (pure JAX, [G, Dp]) ----
    mu = sums * inv_cnt
    # NOTE: E[x^2] - mu^2 can cancel when |mu| >> std; the fused path (preferred
    # whenever x fits in VMEM) uses the exact E[(x - mu)^2] formulation.
    var = jnp.maximum(sumsq * inv_cnt - mu * mu, 0.0)
    rstd = jax.lax.rsqrt(var + eps)
    # Fold into (scale, shift) stacked as one [G, 2*Dp] operand: out = x*scale + shift.
    ss = jnp.concatenate([rstd, -mu * rstd], axis=1)

    # ---- Pass 2: normalize, disjoint output tiles ----
    out_p = pl.pallas_call(
        _normalize_kernel,
        out_shape=jax.ShapeDtypeStruct((n_pad, d_pad), x.dtype),
        grid_spec=pltpu.PrefetchScalarGridSpec(
            num_scalar_prefetch=0,
            grid=(n_pad // tile,),
            in_specs=[
                pl.BlockSpec((1, g), lambda i: (0, 0)),
                pl.BlockSpec((1, g), lambda i: (0, 0)),
                pl.BlockSpec((g, 2 * d_pad), lambda i: (0, 0)),      # (scale, shift), resident
                pl.BlockSpec((tile, d_pad), lambda i: (i, 0)),       # pipelined x tile
            ],
            out_specs=pl.BlockSpec((tile, d_pad), lambda i: (i, 0)),
        ),
        compiler_params=pltpu.CompilerParams(
            dimension_semantics=("parallel",),                       # disjoint writes -> 2 TC on v7x
            vmem_limit_bytes=_VMEM_LIMIT_BYTES,
        ),
    )(offsets.reshape(1, g), ends.reshape(1, g), ss, x_p)

    return out_p[:n, :d]


# ----------------------------------------------------------------------------- #
# Pure-JAX reference (matches the torch/DGL math).
# ----------------------------------------------------------------------------- #
def _reference(x, counts, eps=1e-6):
    n = x.shape[0]
    g = counts.shape[0]
    seg = jnp.repeat(jnp.arange(g), counts, total_repeat_length=n)
    cnt_f = counts.astype(jnp.float32)[:, None]
    xs = x.astype(jnp.float32)
    mu = jax.ops.segment_sum(xs, seg, num_segments=g) / cnt_f
    mu_b = mu[seg]
    var = jax.ops.segment_sum((xs - mu_b) ** 2, seg, num_segments=g) / cnt_f
    std_b = jnp.sqrt(var + eps)[seg]
    return ((xs - mu_b) / std_b).astype(x.dtype)


if __name__ == "__main__":
    # TODO(synk): DGL graph batch bookkeeping is represented as per-graph row counts;
    # only the normalization math (mode='node' / 'edge', same formula) is in Pallas.
    key = jax.random.PRNGKey(0)
    counts = jnp.array([5, 7, 4], dtype=jnp.int32)     # 3 graphs, 16 rows total
    n_total = int(counts.sum())
    d = 96                                             # exercises D -> 128 lane padding
    x = jax.random.normal(key, (n_total, d), dtype=jnp.float32) * 2.0 + 0.5

    ref = _reference(x, counts, eps=1e-6)

    # Fused single-pass path (fits VMEM at these shapes).
    out_fused = jax.block_until_ready(instance_norm(x, counts, eps=1e-6))
    # Two-pass tiled path (forced, exercises cross-tile accumulation + megacore split).
    out_two = jax.block_until_ready(instance_norm(x, counts, eps=1e-6, force_two_pass=True))

    assert out_fused.shape == x.shape and out_fused.dtype == x.dtype
    assert out_two.shape == x.shape and out_two.dtype == x.dtype
    assert jnp.allclose(out_fused, ref, atol=1e-5, rtol=1e-5), "fused path mismatch"
    assert jnp.allclose(out_two, ref, atol=1e-5, rtol=1e-5), "two-pass path mismatch"

    print("KERNEL_OK")
</pallas_src>

<mosaic_0001>
module attributes {stable_mosaic.version = 11 : i64} {
  func.func @_fused_kernel(%arg0: i32, %arg1: memref<3x1xi32, #tpu.memory_space<vmem>>, %arg2: memref<3x1xi32, #tpu.memory_space<vmem>>, %arg3: memref<1x3xi32, #tpu.memory_space<vmem>>, %arg4: memref<1x3xi32, #tpu.memory_space<vmem>>, %arg5: memref<3x1xf32, #tpu.memory_space<vmem>>, %arg6: memref<16x128xf32, #tpu.memory_space<vmem>>, %arg7: memref<16x128xf32, #tpu.memory_space<vmem>>) attributes {dimension_semantics = [#tpu.dimension_semantics<arbitrary>], iteration_bounds = array<i64: 1>, scalar_prefetch = 0 : i64, scratch_operands = 0 : i64, tpu.core_type = #tpu.core_type<tc>, window_params = [{pipeline_mode = #tpu.pipeline_mode<synchronous>, transform_indices = @transform_0, window_bounds = array<i64: 3, 1>}, {pipeline_mode = #tpu.pipeline_mode<synchronous>, transform_indices = @transform_1, window_bounds = array<i64: 3, 1>}, {pipeline_mode = #tpu.pipeline_mode<synchronous>, transform_indices = @transform_2, window_bounds = array<i64: 1, 3>}, {pipeline_mode = #tpu.pipeline_mode<synchronous>, transform_indices = @transform_3, window_bounds = array<i64: 1, 3>}, {pipeline_mode = #tpu.pipeline_mode<synchronous>, transform_indices = @transform_4, window_bounds = array<i64: 3, 1>}, {pipeline_mode = #tpu.pipeline_mode<synchronous>, transform_indices = @transform_5, window_bounds = array<i64: 16, 128>}, {pipeline_mode = #tpu.pipeline_mode<synchronous>, transform_indices = @transform_6, window_bounds = array<i64: 16, 128>}]} {
    %c0 = arith.constant 0 : index
    %c0_0 = arith.constant 0 : index
    %0 = vector.load %arg6[%c0, %c0_0] : memref<16x128xf32, #tpu.memory_space<vmem>>, vector<16x128xf32>
    %1 = tpu.iota {dimensions = array<i32: 1>} : vector<3x16xi32>
    %c0_1 = arith.constant 0 : index
    %c0_2 = arith.constant 0 : index
    %2 = vector.load %arg1[%c0_1, %c0_2] : memref<3x1xi32, #tpu.memory_space<vmem>>, vector<3x1xi32>
    %3 = vector.broadcast %2 : vector<3x1xi32> to vector<3x16xi32>
    %4 = arith.cmpi sge, %1, %3 : vector<3x16xi32>
    %c0_3 = arith.constant 0 : index
    %c0_4 = arith.constant 0 : index
    %5 = vector.load %arg2[%c0_3, %c0_4] : memref<3x1xi32, #tpu.memory_space<vmem>>, vector<3x1xi32>
    %6 = vector.broadcast %5 : vector<3x1xi32> to vector<3x16xi32>
    %7 = arith.cmpi slt, %1, %6 : vector<3x16xi32>
    %8 = arith.andi %4, %7 : vector<3x16xi1>
    %9 = arith.extui %8 : vector<3x16xi1> to vector<3x16xi32>
    %10 = arith.sitofp %9 : vector<3x16xi32> to vector<3x16xf32>
    %11 = tpu.iota {dimensions = array<i32: 0>} : vector<16x3xi32>
    %c0_5 = arith.constant 0 : index
    %c0_6 = arith.constant 0 : index
    %12 = vector.load %arg3[%c0_5, %c0_6] : memref<1x3xi32, #tpu.memory_space<vmem>>, vector<1x3xi32>
    %13 = vector.broadcast %12 : vector<1x3xi32> to vector<16x3xi32>
    %14 = arith.cmpi sge, %11, %13 : vector<16x3xi32>
    %c0_7 = arith.constant 0 : index
    %c0_8 = arith.constant 0 : index
    %15 = vector.load %arg4[%c0_7, %c0_8] : memref<1x3xi32, #tpu.memory_space<vmem>>, vector<1x3xi32>
    %16 = vector.broadcast %15 : vector<1x3xi32> to vector<16x3xi32>
    %17 = arith.cmpi slt, %11, %16 : vector<16x3xi32>
    %18 = arith.andi %14, %17 : vector<16x3xi1>
    %19 = arith.extui %18 : vector<16x3xi1> to vector<16x3xi32>
    %20 = arith.sitofp %19 : vector<16x3xi32> to vector<16x3xf32>
    %c0_9 = arith.constant 0 : index
    %c0_10 = arith.constant 0 : index
    %21 = vector.load %arg5[%c0_9, %c0_10] : memref<3x1xf32, #tpu.memory_space<vmem>>, vector<3x1xf32>
    %cst = arith.constant dense<0.000000e+00> : vector<3x128xf32>
    %22 = tpu.matmul %10, %0, %cst {dimension_numbers = #tpu.dot_dimension_numbers<[1], [0], [0], [1], [0, 0, 1, 1], [], []>} : vector<3x16xf32>, vector<16x128xf32>, vector<3x128xf32> -> vector<3x128xf32>
    %23 = vector.broadcast %21 : vector<3x1xf32> to vector<3x128xf32>
    %24 = arith.mulf %22, %23 : vector<3x128xf32>
    %cst_11 = arith.constant dense<0.000000e+00> : vector<16x128xf32>
    %25 = tpu.matmul %20, %24, %cst_11 {dimension_numbers = #tpu.dot_dimension_numbers<[1], [0], [0], [1], [0, 0, 1, 1], [], []>} : vector<16x3xf32>, vector<3x128xf32>, vector<16x128xf32> -> vector<16x128xf32>
    %26 = arith.subf %0, %25 : vector<16x128xf32>
    %27 = arith.mulf %26, %26 : vector<16x128xf32>
    %cst_12 = arith.constant dense<0.000000e+00> : vector<3x128xf32>
    %28 = tpu.matmul %10, %27, %cst_12 {dimension_numbers = #tpu.dot_dimension_numbers<[1], [0], [0], [1], [0, 0, 1, 1], [], []>} : vector<3x16xf32>, vector<16x128xf32>, vector<3x128xf32> -> vector<3x128xf32>
    %29 = vector.broadcast %21 : vector<3x1xf32> to vector<3x128xf32>
    %30 = arith.mulf %28, %29 : vector<3x128xf32>
    %cst_13 = arith.constant 9.99999997E-7 : f32
    %31 = vector.broadcast %cst_13 : f32 to vector<3x128xf32>
    %32 = arith.addf %30, %31 : vector<3x128xf32>
    %33 = math.rsqrt %32 : vector<3x128xf32>
    %cst_14 = arith.constant dense<0.000000e+00> : vector<16x128xf32>
    %34 = tpu.matmul %20, %33, %cst_14 {dimension_numbers = #tpu.dot_dimension_numbers<[1], [0], [0], [1], [0, 0, 1, 1], [], []>} : vector<16x3xf32>, vector<3x128xf32>, vector<16x128xf32> -> vector<16x128xf32>
    %35 = arith.mulf %26, %34 : vector<16x128xf32>
    %c0_15 = arith.constant 0 : index
    %c0_16 = arith.constant 0 : index
    %36 = vector.load %arg7[%c0_15, %c0_16] : memref<16x128xf32, #tpu.memory_space<vmem>>, vector<16x128xf32>
    tpu.vector_store %arg7[%c0_15, %c0_16], %35 {strides = array<i32>} : memref<16x128xf32, #tpu.memory_space<vmem>>, vector<16x128xf32>,
    return
  }
  func.func @transform_0(%arg0: i32) -> (i32, i32) {
    %c0_i32 = arith.constant 0 : i32
    %c0_i32_0 = arith.constant 0 : i32
    %c0_i32_1 = arith.constant 0 : i32
    return %c0_i32, %c0_i32_0 : i32, i32
  }
  func.func @transform_1(%arg0: i32) -> (i32, i32) {
    %c0_i32 = arith.constant 0 : i32
    %c0_i32_0 = arith.constant 0 : i32
    %c0_i32_1 = arith.constant 0 : i32
    return %c0_i32, %c0_i32_0 : i32, i32
  }
  func.func @transform_2(%arg0: i32) -> (i32, i32) {
    %c0_i32 = arith.constant 0 : i32
    %c0_i32_0 = arith.constant 0 : i32
    %c0_i32_1 = arith.constant 0 : i32
    return %c0_i32, %c0_i32_0 : i32, i32
  }
  func.func @transform_3(%arg0: i32) -> (i32, i32) {
    %c0_i32 = arith.constant 0 : i32
    %c0_i32_0 = arith.constant 0 : i32
    %c0_i32_1 = arith.constant 0 : i32
    return %c0_i32, %c0_i32_0 : i32, i32
  }
  func.func @transform_4(%arg0: i32) -> (i32, i32) {
    %c0_i32 = arith.constant 0 : i32
    %c0_i32_0 = arith.constant 0 : i32
    %c0_i32_1 = arith.constant 0 : i32
    return %c0_i32, %c0_i32_0 : i32, i32
  }
  func.func @transform_5(%arg0: i32) -> (i32, i32) {
    %c0_i32 = arith.constant 0 : i32
    %c0_i32_0 = arith.constant 0 : i32
    %c0_i32_1 = arith.constant 0 : i32
    return %c0_i32, %c0_i32_0 : i32, i32
  }
  func.func @transform_6(%arg0: i32) -> (i32, i32) {
    %c0_i32 = arith.constant 0 : i32
    %c0_i32_0 = arith.constant 0 : i32
    %c0_i32_1 = arith.constant 0 : i32
    return %c0_i32, %c0_i32_0 : i32, i32
  }
}

</mosaic_0001>

<llo_original>
// kernel: tpu_custom_call.1
$region0: #{tpu_custom_call.1}
  #allocation0 [shape = 'u32[]', space=smem, size = 0x4, offset = 0x4, fixed_abs, tag = 'smem constant byte address 0x4 - core index']
  #allocation1 [shape = 'u32[144,128]{1,0:T(1,128)}', space=vmem, size = 0x12000, scoped, tag = 'internal scratch']
  %s0 = inlined_call_operand.vmem [shape: s32[3,1], index: 0, kind: input, shape index: {}]
  %s1 = inlined_call_operand.vmem [shape: s32[3,1], index: 1, kind: input, shape index: {}]
  %s2 = inlined_call_operand.vmem [shape: s32[1,3], index: 2, kind: input, shape index: {}]
  %s3 = inlined_call_operand.vmem [shape: s32[1,3], index: 3, kind: input, shape index: {}]
  %s4 = inlined_call_operand.vmem [shape: f32[3,1], index: 4, kind: input, shape index: {}]
  %s5 = inlined_call_operand.vmem [shape: f32[16,128], index: 5, kind: input, shape index: {}]
  %s6 = inlined_call_operand.hbm [shape: f32[16,128], index: 6, kind: output, shape index: {}]
  %s7 = sld [smem:[#allocation0]]
  $region34: #{tpu_custom_call.1} parent=0
    _
  %s9 = ssub.s32 1, %s7
  %s10 = scalar_select 0, %s9, %s7
  $region1: #{tpu_custom_call.1} parent=0
    #allocation2 [shape = 'u8[8192]{0}', space=vmem, size = 0x2000, scoped, tag = 'output window, operand 0, single buffered']
    #allocation3 [shape = 's32[1]{0}', space=sflag, size = 0x4, scoped, tag = 'scoped memory for tpu_custom_call.1']
    %11 = vsyncpa [#allocation3], 0
    // Predicated region
    $region2: #{tpu_custom_call.1} parent=1 // pred_check
      _
    $region3: #{tpu_custom_call.1} parent=1 // pred_check_branch
      %13 = sbr.rel (0) target = $region5
    $region4: #{tpu_custom_call.1} parent=1 // pred_region
      _
    $region5: #{tpu_custom_call.1} parent=1 // pred_fallthru
      _
    // Predicated region
    $region6: #{tpu_custom_call.1} parent=1 // pred_check
      _
    $region7: #{tpu_custom_call.1} parent=1 // pred_check_branch
      %15 = sbr.rel (0) target = $region9
    $region8: #{tpu_custom_call.1} parent=1 // pred_region
      _
    $region9: #{tpu_custom_call.1} parent=1 // pred_fallthru
      _
    // Predicated region
    $region10: #{tpu_custom_call.1} parent=1 // pred_check
      _
    $region11: #{tpu_custom_call.1} parent=1 // pred_check_branch
      %17 = sbr.rel (0) target = $region13
    $region12: #{tpu_custom_call.1} parent=1 // pred_region
      _
    $region13: #{tpu_custom_call.1} parent=1 // pred_fallthru
      _
    // Predicated region
    $region14: #{tpu_custom_call.1} parent=1 // pred_check
      _
    $region15: #{tpu_custom_call.1} parent=1 // pred_check_branch
      %19 = sbr.rel (0) target = $region17
    $region16: #{tpu_custom_call.1} parent=1 // pred_region
      _
    $region17: #{tpu_custom_call.1} parent=1 // pred_fallthru
      _
    // Predicated region
    $region18: #{tpu_custom_call.1} parent=1 // pred_check
      _
    $region19: #{tpu_custom_call.1} parent=1 // pred_check_branch
      %21 = sbr.rel (0) target = $region21
    $region20: #{tpu_custom_call.1} parent=1 // pred_region
      _
    $region21: #{tpu_custom_call.1} parent=1 // pred_fallthru
      _
    // Predicated region
    $region22: #{tpu_custom_call.1} parent=1 // pred_check
      _
    $region23: #{tpu_custom_call.1} parent=1 // pred_check_branch
      %23 = sbr.rel (0) target = $region25
    $region24: #{tpu_custom_call.1} parent=1 // pred_region
      _
    $region25: #{tpu_custom_call.1} parent=1 // pred_fallthru
      _
    %v24 = vld [vmem:[%s5] sm:$0xff]
    %v25 = vld [vmem:[%s5 + $0x8] sm:$0xff]
    %v26 = vlaneseq
    %v27 = vand.u32 %v26, 127
    %v28 = vld [vmem:[%s0] sm:$0x7]
    %29 = vset.pattern.permute.xlu0 0
    %30 = vperm.xlu0 %29, %v28
    %v31 = vpop.permute.xlu0 %30
    %vm32 = vcmp.ge.s32.totalorder %v27, %v31
    %v33 = vld [vmem:[%s1] sm:$0x7]
    %34 = vset.pattern.permute.xlu0 0
    %35 = vperm.xlu0 %34, %v33
    %v36 = vpop.permute.xlu0 %35
    %vm37 = vcmp.lt.s32.totalorder %v27, %v36
    %vm38 = vmand %vm32, %vm37
    %v39 = vsel %vm38, 1, 0
    %v40 = vcvt.s32.f32 %v39
    %v41 = vlaneseq
    %v42 = vshrl.u32 %v41, 7
    %v43 = vadd.s32 %v42, 8
    %v44 = vld [vmem:[%s2] sm:$0x1]
    %v45 = vlaneseq
    %v46 = vshrl.u32 %v45, 7
    %v47 = vsub.s32 0, %v46
    %v48 = vrot.slane %v44, %v47
    %vm49 = vcmp.ge.s32.totalorder %v42, %v48
    %vm50 = vcmp.ge.s32.totalorder %v43, %v48
    %v51 = vld [vmem:[%s3] sm:$0x1]
    %v52 = vlaneseq
    %v53 = vshrl.u32 %v52, 7
    %v54 = vsub.s32 0, %v53
    %v55 = vrot.slane %v51, %v54
    %vm56 = vcmp.lt.s32.totalorder %v42, %v55
    %vm57 = vcmp.lt.s32.totalorder %v43, %v55
    %vm58 = vmand %vm49, %vm56
    %vm59 = vmand %vm50, %vm57
    %v60 = vsel %vm58, 1, 0
    %v61 = vsel %vm59, 1, 0
    %v62 = vcvt.s32.f32 %v60
    %v63 = vcvt.s32.f32 %v61
    %v64 = vld [vmem:[%s4] sm:$0x7]
    %vm65 = vcmask 130048
    %v67 = vsel %vm65, %v40, 0
    %69 = vmatprep.subr.mxu0 0.0
    %70 = vmatpush1.msra.mxu0 0.0
    %71 = vmatprep.subr.mxu0 0.0
    %72 = vmatpush1.msra.mxu0 0.0
    %73 = vmatprep.subr.mxu0 0.0
    %74 = vmatpush1.msra.mxu0 0.0
    %75 = vmatprep.subr.mxu0 0.0
    %76 = vmatpush1.msra.mxu0 0.0
    %77 = vmatprep.subr.mxu0 0.0
    %78 = vmatpush1.msra.mxu0 0.0
    %79 = vmatprep.subr.mxu0 0.0
    %80 = vmatpush1.msra.mxu0 0.0
    %81 = vmatprep.subr.mxu0 0.0
    %82 = vmatpush1.msra.mxu0 0.0
    %83 = vmatprep.subr.mxu0 0.0
    %84 = vmatpush1.msra.mxu0 0.0
    %85 = vmatprep.subr.mxu0 0.0
    %86 = vmatpush1.msra.mxu0 0.0
    %87 = vmatprep.subr.mxu0 0.0
    %88 = vmatpush1.msra.mxu0 0.0
    %89 = vmatprep.subr.mxu0 0.0
    %90 = vmatpush1.msra.mxu0 0.0
    %91 = vmatprep.subr.mxu0 0.0
    %92 = vmatpush1.msra.mxu0 0.0
    %93 = vmatprep.subr.mxu0 0.0
    %94 = vmatpush1.msra.mxu0 0.0
    %95 = vmatprep.subr.mxu0 0.0
    %96 = vmatpush1.msra.mxu0 0.0
    %97 = vmatprep.subr.mxu0 0.0
    %98 = vmatpush1.msra.mxu0 %v25
    %99 = vmatprep.subr.mxu0 0.0
    %100 = vmatpush1.msra.mxu0 %v24
    %101 = vmatprep.subr.mxu0 0.0
    %102 = vmatpush2.msra.mxu0 0.0
    %103 = vmatprep.subr.mxu0 0.0
    %104 = vmatpush2.msra.mxu0 0.0
    %105 = vmatprep.subr.mxu0 0.0
    %106 = vmatpush2.msra.mxu0 0.0
    %107 = vmatprep.subr.mxu0 0.0
    %108 = vmatpush2.msra.mxu0 0.0
    %109 = vmatprep.subr.mxu0 0.0
    %110 = vmatpush2.msra.mxu0 0.0
    %111 = vmatprep.subr.mxu0 0.0
    %112 = vmatpush2.msra.mxu0 0.0
    %113 = vmatprep.subr.mxu0 0.0
    %114 = vmatpush2.msra.mxu0 0.0
    %115 = vmatprep.subr.mxu0 0.0
    %116 = vmatpush2.msra.mxu0 0.0
    %117 = vmatprep.subr.mxu0 0.0
    %118 = vmatpush2.msra.mxu0 0.0
    %119 = vmatprep.subr.mxu0 0.0
    %120 = vmatpush2.msra.mxu0 0.0
    %121 = vmatprep.subr.mxu0 0.0
    %122 = vmatpush2.msra.mxu0 0.0
    %123 = vmatprep.subr.mxu0 0.0
    %124 = vmatpush2.msra.mxu0 0.0
    %125 = vmatprep.subr.mxu0 0.0
    %126 = vmatpush2.msra.mxu0 0.0
    %127 = vmatprep.subr.mxu0 0.0
    %128 = vmatpush2.msra.mxu0 0.0
    %129 = vmatprep.subr.mxu0 0.0
    %130 = vmatpush2.msra.mxu0 0.0
    %131 = vmatprep.subr.mxu0 0.0
    %132 = vmatpush2.msra.mxu0 0.0
    %133 = vmatprep.mubr.f32.mxu0 0.0
    %134 = vmatmul.mubr.f32.gmra.mxu0 %v67
    %v135 = vpop.f32.mrf.mxu0
    %v136 = vadd.f32 0.0, %v135
    %v137 = vpop.f32.mrf.mxu0
    %138 = vdwg.mxu0
    %140 = vset.pattern.permute.xlu0 0
    %141 = vperm.xlu0 %140, %v64
    %v142 = vpop.permute.xlu0 %141
    %v144 = vmul.f32 %v136, %v142
    %vm145 = vcmask 23552
    %v147 = vsel %vm145, %v62, 0
    %v150 = vsel %vm145, %v63, 0
    %vm152 = vcmask 1042432
    %v154 = vsel %vm152, %v144, 0
    %156 = vmatprep.subr.mxu0 0.0
    %157 = vmatpush1.msra.mxu0 0.0
    %158 = vmatprep.subr.mxu0 0.0
    %159 = vmatpush1.msra.mxu0 0.0
    %160 = vmatprep.subr.mxu0 0.0
    %161 = vmatpush1.msra.mxu0 0.0
    %162 = vmatprep.subr.mxu0 0.0
    %163 = vmatpush1.msra.mxu0 0.0
    %164 = vmatprep.subr.mxu0 0.0
    %165 = vmatpush1.msra.mxu0 0.0
    %166 = vmatprep.subr.mxu0 0.0
    %167 = vmatpush1.msra.mxu0 0.0
    %168 = vmatprep.subr.mxu0 0.0
    %169 = vmatpush1.msra.mxu0 0.0
    %170 = vmatprep.subr.mxu0 0.0
    %171 = vmatpush1.msra.mxu0 0.0
    %172 = vmatprep.subr.mxu0 0.0
    %173 = vmatpush1.msra.mxu0 0.0
    %174 = vmatprep.subr.mxu0 0.0
    %175 = vmatpush1.msra.mxu0 0.0
    %176 = vmatprep.subr.mxu0 0.0
    %177 = vmatpush1.msra.mxu0 0.0
    %178 = vmatprep.subr.mxu0 0.0
    %179 = vmatpush1.msra.mxu0 0.0
    %180 = vmatprep.subr.mxu0 0.0
    %181 = vmatpush1.msra.mxu0 0.0
    %182 = vmatprep.subr.mxu0 0.0
    %183 = vmatpush1.msra.mxu0 0.0
    %184 = vmatprep.subr.mxu0 0.0
    %185 = vmatpush1.msra.mxu0 0.0
    %186 = vmatprep.subr.mxu0 0.0
    %187 = vmatpush1.msra.mxu0 %v154
    %188 = vmatprep.subr.mxu0 0.0
    %189 = vmatpush2.msra.mxu0 0.0
    %190 = vmatprep.subr.mxu0 0.0
    %191 = vmatpush2.msra.mxu0 0.0
    %192 = vmatprep.subr.mxu0 0.0
    %193 = vmatpush2.msra.mxu0 0.0
    %194 = vmatprep.subr.mxu0 0.0
    %195 = vmatpush2.msra.mxu0 0.0
    %196 = vmatprep.subr.mxu0 0.0
    %197 = vmatpush2.msra.mxu0 0.0
    %198 = vmatprep.subr.mxu0 0.0
    %199 = vmatpush2.msra.mxu0 0.0
    %200 = vmatprep.subr.mxu0 0.0
    %201 = vmatpush2.msra.mxu0 0.0
    %202 = vmatprep.subr.mxu0 0.0
    %203 = vmatpush2.msra.mxu0 0.0
    %204 = vmatprep.subr.mxu0 0.0
    %205 = vmatpush2.msra.mxu0 0.0
    %206 = vmatprep.subr.mxu0 0.0
    %207 = vmatpush2.msra.mxu0 0.0
    %208 = vmatprep.subr.mxu0 0.0
    %209 = vmatpush2.msra.mxu0 0.0
    %210 = vmatprep.subr.mxu0 0.0
    %211 = vmatpush2.msra.mxu0 0.0
    %212 = vmatprep.subr.mxu0 0.0
    %213 = vmatpush2.msra.mxu0 0.0
    %214 = vmatprep.subr.mxu0 0.0
    %215 = vmatpush2.msra.mxu0 0.0
    %216 = vmatprep.subr.mxu0 0.0
    %217 = vmatpush2.msra.mxu0 0.0
    %218 = vmatprep.subr.mxu0 0.0
    %219 = vmatpush2.msra.mxu0 0.0
    %220 = vmatprep.mubr.f32.mxu0 0.0
    %221 = vmatmul.mubr.f32.gmra.mxu0 %v147
    %v222 = vpop.f32.mrf.mxu0
    %v223 = vadd.f32 0.0, %v222
    %v224 = vpop.f32.mrf.mxu0
    %225 = vmatprep.mubr.f32.mxu0 0.0
    %226 = vmatmul.mubr.f32.gmra.mxu0 %v150
    %v227 = vpop.f32.mrf.mxu0
    %v228 = vadd.f32 0.0, %v227
    %v229 = vpop.f32.mrf.mxu0
    %230 = vdwg.mxu0
    %v231 = vsub.f32 %v24, %v223
    %v232 = vsub.f32 %v25, %v228
    %v233 = vmul.f32 %v231, %v231
    %v234 = vmul.f32 %v232, %v232
    %235 = vmatprep.subr.mxu0 0.0
    %236 = vmatpush1.msra.mxu0 0.0
    %237 = vmatprep.subr.mxu0 0.0
    %238 = vmatpush1.msra.mxu0 0.0
    %239 = vmatprep.subr.mxu0 0.0
    %240 = vmatpush1.msra.mxu0 0.0
    %241 = vmatprep.subr.mxu0 0.0
    %242 = vmatpush1.msra.mxu0 0.0
    %243 = vmatprep.subr.mxu0 0.0
    %244 = vmatpush1.msra.mxu0 0.0
    %245 = vmatprep.subr.mxu0 0.0
    %246 = vmatpush1.msra.mxu0 0.0
    %247 = vmatprep.subr.mxu0 0.0
    %248 = vmatpush1.msra.mxu0 0.0
    %249 = vmatprep.subr.mxu0 0.0
    %250 = vmatpush1.msra.mxu0 0.0
    %251 = vmatprep.subr.mxu0 0.0
    %252 = vmatpush1.msra.mxu0 0.0
    %253 = vmatprep.subr.mxu0 0.0
    %254 = vmatpush1.msra.mxu0 0.0
    %255 = vmatprep.subr.mxu0 0.0
    %256 = vmatpush1.msra.mxu0 0.0
    %257 = vmatprep.subr.mxu0 0.0
    %258 = vmatpush1.msra.mxu0 0.0
    %259 = vmatprep.subr.mxu0 0.0
    %260 = vmatpush1.msra.mxu0 0.0
    %261 = vmatprep.subr.mxu0 0.0
    %262 = vmatpush1.msra.mxu0 0.0
    %263 = vmatprep.subr.mxu0 0.0
    %264 = vmatpush1.msra.mxu0 %v234
    %265 = vmatprep.subr.mxu0 0.0
    %266 = vmatpush1.msra.mxu0 %v233
    %267 = vmatprep.subr.mxu0 0.0
    %268 = vmatpush2.msra.mxu0 0.0
    %269 = vmatprep.subr.mxu0 0.0
    %270 = vmatpush2.msra.mxu0 0.0
    %271 = vmatprep.subr.mxu0 0.0
    %272 = vmatpush2.msra.mxu0 0.0
    %273 = vmatprep.subr.mxu0 0.0
    %274 = vmatpush2.msra.mxu0 0.0
    %275 = vmatprep.subr.mxu0 0.0
    %276 = vmatpush2.msra.mxu0 0.0
    %277 = vmatprep.subr.mxu0 0.0
    %278 = vmatpush2.msra.mxu0 0.0
    %279 = vmatprep.subr.mxu0 0.0
    %280 = vmatpush2.msra.mxu0 0.0
    %281 = vmatprep.subr.mxu0 0.0
    %282 = vmatpush2.msra.mxu0 0.0
    %283 = vmatprep.subr.mxu0 0.0
    %284 = vmatpush2.msra.mxu0 0.0
    %285 = vmatprep.subr.mxu0 0.0
    %286 = vmatpush2.msra.mxu0 0.0
    %287 = vmatprep.subr.mxu0 0.0
    %288 = vmatpush2.msra.mxu0 0.0
    %289 = vmatprep.subr.mxu0 0.0
    %290 = vmatpush2.msra.mxu0 0.0
    %291 = vmatprep.subr.mxu0 0.0
    %292 = vmatpush2.msra.mxu0 0.0
    %293 = vmatprep.subr.mxu0 0.0
    %294 = vmatpush2.msra.mxu0 0.0
    %295 = vmatprep.subr.mxu0 0.0
    %296 = vmatpush2.msra.mxu0 0.0
    %297 = vmatprep.subr.mxu0 0.0
    %298 = vmatpush2.msra.mxu0 0.0
    %299 = vmatprep.mubr.f32.mxu0 0.0
    %300 = vmatmul.mubr.f32.gmra.mxu0 %v67
    %v301 = vpop.f32.mrf.mxu0
    %v302 = vadd.f32 0.0, %v301
    %v303 = vpop.f32.mrf.mxu0
    %304 = vdwg.mxu0
    %v305 = vmul.f32 %v302, %v142
    %v306 = vadd.f32 %v305, 1e-06
    %v307 = vrsqrt.pop %v306
    %v309 = vsel %vm152, %v307, 0
    %311 = vmatprep.subr.mxu0 0.0
    %312 = vmatpush1.msra.mxu0 0.0
    %313 = vmatprep.subr.mxu0 0.0
    %314 = vmatpush1.msra.mxu0 0.0
    %315 = vmatprep.subr.mxu0 0.0
    %316 = vmatpush1.msra.mxu0 0.0
    %317 = vmatprep.subr.mxu0 0.0
    %318 = vmatpush1.msra.mxu0 0.0
    %319 = vmatprep.subr.mxu0 0.0
    %320 = vmatpush1.msra.mxu0 0.0
    %321 = vmatprep.subr.mxu0 0.0
    %322 = vmatpush1.msra.mxu0 0.0
    %323 = vmatprep.subr.mxu0 0.0
    %324 = vmatpush1.msra.mxu0 0.0
    %325 = vmatprep.subr.mxu0 0.0
    %326 = vmatpush1.msra.mxu0 0.0
    %327 = vmatprep.subr.mxu0 0.0
    %328 = vmatpush1.msra.mxu0 0.0
    %329 = vmatprep.subr.mxu0 0.0
    %330 = vmatpush1.msra.mxu0 0.0
    %331 = vmatprep.subr.mxu0 0.0
    %332 = vmatpush1.msra.mxu0 0.0
    %333 = vmatprep.subr.mxu0 0.0
    %334 = vmatpush1.msra.mxu0 0.0
    %335 = vmatprep.subr.mxu0 0.0
    %336 = vmatpush1.msra.mxu0 0.0
    %337 = vmatprep.subr.mxu0 0.0
    %338 = vmatpush1.msra.mxu0 0.0
    %339 = vmatprep.subr.mxu0 0.0
    %340 = vmatpush1.msra.mxu0 0.0
    %341 = vmatprep.subr.mxu0 0.0
    %342 = vmatpush1.msra.mxu0 %v309
    %343 = vmatprep.subr.mxu0 0.0
    %344 = vmatpush2.msra.mxu0 0.0
    %345 = vmatprep.subr.mxu0 0.0
    %346 = vmatpush2.msra.mxu0 0.0
    %347 = vmatprep.subr.mxu0 0.0
    %348 = vmatpush2.msra.mxu0 0.0
    %349 = vmatprep.subr.mxu0 0.0
    %350 = vmatpush2.msra.mxu0 0.0
    %351 = vmatprep.subr.mxu0 0.0
    %352 = vmatpush2.msra.mxu0 0.0
    %353 = vmatprep.subr.mxu0 0.0
    %354 = vmatpush2.msra.mxu0 0.0
    %355 = vmatprep.subr.mxu0 0.0
    %356 = vmatpush2.msra.mxu0 0.0
    %357 = vmatprep.subr.mxu0 0.0
    %358 = vmatpush2.msra.mxu0 0.0
    %359 = vmatprep.subr.mxu0 0.0
    %360 = vmatpush2.msra.mxu0 0.0
    %361 = vmatprep.subr.mxu0 0.0
    %362 = vmatpush2.msra.mxu0 0.0
    %363 = vmatprep.subr.mxu0 0.0
    %364 = vmatpush2.msra.mxu0 0.0
    %365 = vmatprep.subr.mxu0 0.0
    %366 = vmatpush2.msra.mxu0 0.0
    %367 = vmatprep.subr.mxu0 0.0
    %368 = vmatpush2.msra.mxu0 0.0
    %369 = vmatprep.subr.mxu0 0.0
    %370 = vmatpush2.msra.mxu0 0.0
    %371 = vmatprep.subr.mxu0 0.0
    %372 = vmatpush2.msra.mxu0 0.0
    %373 = vmatprep.subr.mxu0 0.0
    %374 = vmatpush2.msra.mxu0 0.0
    %375 = vmatprep.mubr.f32.mxu0 0.0
    %376 = vmatmul.mubr.f32.gmra.mxu0 %v147
    %v377 = vpop.f32.mrf.mxu0
    %v378 = vadd.f32 0.0, %v377
    %v379 = vpop.f32.mrf.mxu0
    %380 = vmatprep.mubr.f32.mxu0 0.0
    %381 = vmatmul.mubr.f32.gmra.mxu0 %v150
    %v382 = vpop.f32.mrf.mxu0
    %v383 = vadd.f32 0.0, %v382
    %v384 = vpop.f32.mrf.mxu0
    %385 = vdwg.mxu0
    %v386 = vmul.f32 %v231, %v378
    %v387 = vmul.f32 %v232, %v383
    %388 = vst [vmem:[#allocation2] sm:$0xff] %v386
    %389 = vst [vmem:[#allocation2 + $0x8] sm:$0xff] %v387
    // Predicated region
    $region26: #{tpu_custom_call.1} parent=1 // pred_check
      _
    $region27: #{tpu_custom_call.1} parent=1 // pred_check_branch
      %391 = sbr.rel (0) target = $region29
    $region28: #{tpu_custom_call.1} parent=1 // pred_region
      %s393 = ssub.s32 256, 256
      %394 = vsyncadd [#allocation3], %s393
      %s395 = sshll.u32 [#allocation2], 4
      %s396 = int_to_ptr.vmem [resolvable:$true] %s395
      %401 = dma.vmem_to_hbm [thread:$0]  %s396, 256, %s6, [#allocation3], 128, 128, 8
    $region29: #{tpu_custom_call.1} parent=1 // pred_fallthru
      _
    // Predicated region
    $region30: #{tpu_custom_call.1} parent=1 // pred_check
      _
    $region31: #{tpu_custom_call.1} parent=1 // pred_check_branch
      %403 = sbr.rel (0) target = $region33
    $region32: #{tpu_custom_call.1} parent=1 // pred_region
      %404 = dma.done [#allocation3], 256
    $region33: #{tpu_custom_call.1} parent=1 // pred_fallthru
      _
    %405 = vsyncpa [#allocation3], 1

</llo_original>
